<compile_context>
chip_gen: v7x
topology: tpu7x:2x2x1
jax: 0.10.0
libtpu: 0.0.40
codegen_flags: <defaults>
</compile_context>

<pallas_src>
import math

import jax
import jax.numpy as jnp
from jax import lax
from jax.experimental import pallas as pl
from jax.experimental.pallas import tpu as pltpu

MODEL_DIM = 32
MAX_LEN = 64
DROPOUT_P = 0.1

_KEEP_SCALE = 1.0 / (1.0 - DROPOUT_P)
_DROP_THRESHOLD = int(round(DROPOUT_P * float(2 ** 32)))  # drop iff bits < threshold


def make_positional_encoding(model_dim: int, max_len: int) -> jnp.ndarray:
    """Deterministic buffer, identical to the PyTorch __init__ math."""
    position = jnp.arange(max_len, dtype=jnp.float32)[:, None]            # (max_len, 1)
    div_term = jnp.exp(
        jnp.arange(0, model_dim, 2, dtype=jnp.float32)
        * -(math.log(10000.0) / model_dim)
    )                                                                      # (model_dim//2,)
    angles = position * div_term                                           # (max_len, model_dim//2)
    pe = jnp.zeros((max_len, model_dim), dtype=jnp.float32)
    pe = pe.at[:, 0::2].set(jnp.sin(angles))
    pe = pe.at[:, 1::2].set(jnp.cos(angles))
    return pe[None]                                                        # (1, max_len, model_dim)


# ---------------------------------------------------------------------------
# Kernels
# ---------------------------------------------------------------------------
def _pe_add_kernel(x_ref, pe_ref, o_ref):
    # (R, C) + (1, C) broadcast add — pure VPU elementwise, lane-dense store.
    o_ref[...] = x_ref[...] + pe_ref[...]


def _pe_add_dropout_kernel(x_ref, pe_ref, seed_ref, o_ref):
    y = x_ref[...] + pe_ref[...]                                  # (R, C)
    rows, cols = y.shape

    # ---- counter-based uniform bits (lowbias32-style hash) ----------------
    # Unique counter per element of the WHOLE output (row offset includes the
    # grid step), so every tile gets an independent mask from one scalar seed.
    r = lax.broadcasted_iota(jnp.int32, (rows, cols), 0)
    c = lax.broadcasted_iota(jnp.int32, (rows, cols), 1)
    lin = (pl.program_id(0) * rows + r) * cols + c
    h = lin.astype(jnp.uint32)
    h = h + seed_ref[0].astype(jnp.uint32) * jnp.uint32(0x9E3779B9)
    h = h ^ (h >> 16)
    h = h * jnp.uint32(0x7FEB352D)
    h = h ^ (h >> 15)
    h = h * jnp.uint32(0x846CA68B)
    h = h ^ (h >> 16)

    keep = h >= jnp.uint32(_DROP_THRESHOLD)                       # P(keep) = 1 - p
    scale = jnp.asarray(_KEEP_SCALE, dtype=y.dtype)
    o_ref[...] = jnp.where(keep, y * scale, jnp.zeros_like(y)).astype(o_ref.dtype)


# ---------------------------------------------------------------------------
# Wrapper
# ---------------------------------------------------------------------------
def _row_block(n_rows: int, n_cols: int, itemsize: int) -> int:
    """Largest row tile that is (8,·)-legal and keeps double-buffered VMEM small."""
    # ~2 MiB per block: (x + out) * 2 buffers + hash intermediates stays well under
    # the 16 MiB scoped-VMEM default on v5e (32 MiB on v6e/v7x, 64 MiB physical v7x).
    vmem_cap_rows = max(1, (2 * 1024 * 1024) // max(1, n_cols * itemsize))
    block = min(n_rows, 512, vmem_cap_rows)
    if block < n_rows:
        block = max(8, (block // 8) * 8)      # second-minor dim must be a multiple of 8
    return block


def positional_encoding_forward(x, pe, *, training=False, seed=0,
                                use_pallas_for_eval=True, donate_x=False):
    """x: (seq_len, batch, model_dim); pe: (1, max_len, model_dim)."""
    seq_len = x.shape[0]
    pe_slice = pe[:, :seq_len]                                    # (1, S, D)
    out_shape = jnp.broadcast_shapes(x.shape, pe_slice.shape)     # torch broadcast rule
    s_out, b_out, d = out_shape

    if not training and not use_pallas_for_eval:
        # Tiny eval-mode inputs: cheaper to let XLA fuse the add with neighbors than
        # to pay the custom-call / per-grid-step overhead.
        return (x + pe_slice).astype(x.dtype)

    # ---- lane-dense 2-D views: rows = seq axis, cols = batch*model_dim ----
    n_cols = b_out * d
    x2d = jnp.broadcast_to(x, out_shape).reshape(s_out, n_cols)
    pe_row = (jnp.broadcast_to(pe_slice[0], (b_out, d))
              .reshape(1, n_cols).astype(x.dtype))                # one tiny resident row

    block_rows = _row_block(s_out, n_cols, jnp.dtype(x.dtype).itemsize)
    grid = (pl.cdiv(s_out, block_rows),)

    x_spec = pl.BlockSpec((block_rows, n_cols), lambda i: (i, 0))
    pe_spec = pl.BlockSpec((1, n_cols), lambda i: (0, 0))         # same block every step
    o_spec = pl.BlockSpec((block_rows, n_cols), lambda i: (i, 0))
    cparams = pltpu.CompilerParams(dimension_semantics=("parallel",))
    aliases = {0: 0} if donate_x else {}                          # optional HBM reuse

    if not training:
        out2d = pl.pallas_call(
            _pe_add_kernel,
            out_shape=jax.ShapeDtypeStruct((s_out, n_cols), x.dtype),
            grid=grid,
            in_specs=[x_spec, pe_spec],
            out_specs=o_spec,
            compiler_params=cparams,
            input_output_aliases=aliases,
        )(x2d, pe_row)
        return out2d.reshape(out_shape)

    seed_arr = jnp.asarray([seed], dtype=jnp.int32)
    out2d = pl.pallas_call(
        _pe_add_dropout_kernel,
        out_shape=jax.ShapeDtypeStruct((s_out, n_cols), x.dtype),
        grid=grid,
        in_specs=[x_spec, pe_spec,
                  pl.BlockSpec(memory_space=pltpu.MemorySpace.SMEM)],
        out_specs=o_spec,
        compiler_params=cparams,
        input_output_aliases=aliases,
    )(x2d, pe_row, seed_arr)
    return out2d.reshape(out_shape)


# ---------------------------------------------------------------------------
# Demo / self-check
# ---------------------------------------------------------------------------
if __name__ == "__main__":
    SEQ = 8
    BATCH = 8          # must equal SEQ for the module's (S,B,D)+(1,S,D) broadcast
    key = jax.random.PRNGKey(0)
    x = jax.random.normal(key, (SEQ, BATCH, MODEL_DIM), dtype=jnp.float32)

    pe = make_positional_encoding(MODEL_DIM, MAX_LEN)
    ref = x + pe[:, :SEQ]

    # eval mode (dropout = identity): must match the plain-JAX reference exactly
    out_eval = jax.block_until_ready(positional_encoding_forward(x, pe, training=False))
    assert out_eval.shape == ref.shape, (out_eval.shape, ref.shape)
    assert jnp.allclose(out_eval, ref, atol=1e-6, rtol=1e-6), "eval-mode mismatch"

    # training mode (fused add + inverted dropout in-kernel): structural checks
    out_train = jax.block_until_ready(positional_encoding_forward(x, pe, training=True, seed=0))
    assert out_train.shape == ref.shape
    assert bool(jnp.all(jnp.isfinite(out_train)))
    kept = out_train != 0
    # kept elements are ref / (1 - p); dropped elements are exactly 0
    assert jnp.allclose(
        jnp.where(kept, out_train, 0.0),
        jnp.where(kept, ref / (1.0 - DROPOUT_P), 0.0),
        atol=1e-5, rtol=1e-5,
    )
    drop_frac = 1.0 - float(jnp.mean(kept.astype(jnp.float32)))
    assert 0.0 < drop_frac < 0.5, f"implausible dropout fraction {drop_frac}"

    print("KERNEL_OK")
</pallas_src>

<mosaic_0001>
module attributes {stable_mosaic.version = 11 : i64} {
  func.func @_pe_add_kernel(%arg0: i32, %arg1: memref<8x256xf32, #tpu.memory_space<vmem>>, %arg2: memref<1x256xf32, #tpu.memory_space<vmem>>, %arg3: memref<8x256xf32, #tpu.memory_space<vmem>>) attributes {dimension_semantics = [#tpu.dimension_semantics<parallel>], iteration_bounds = array<i64: 1>, scalar_prefetch = 0 : i64, scratch_operands = 0 : i64, tpu.core_type = #tpu.core_type<tc>, window_params = [{transform_indices = @transform_0, window_bounds = array<i64: 8, 256>}, {pipeline_mode = #tpu.pipeline_mode<synchronous>, transform_indices = @transform_1, window_bounds = array<i64: 1, 256>}, {transform_indices = @transform_2, window_bounds = array<i64: 8, 256>}]} {
    %c0 = arith.constant 0 : index
    %c0_0 = arith.constant 0 : index
    %0 = vector.load %arg1[%c0, %c0_0] : memref<8x256xf32, #tpu.memory_space<vmem>>, vector<8x256xf32>
    %c0_1 = arith.constant 0 : index
    %c0_2 = arith.constant 0 : index
    %1 = vector.load %arg2[%c0_1, %c0_2] : memref<1x256xf32, #tpu.memory_space<vmem>>, vector<1x256xf32>
    %2 = vector.broadcast %1 : vector<1x256xf32> to vector<8x256xf32>
    %3 = arith.addf %0, %2 : vector<8x256xf32>
    %c0_3 = arith.constant 0 : index
    %c0_4 = arith.constant 0 : index
    %4 = vector.load %arg3[%c0_3, %c0_4] : memref<8x256xf32, #tpu.memory_space<vmem>>, vector<8x256xf32>
    tpu.vector_store %arg3[%c0_3, %c0_4], %3 {strides = array<i32>} : memref<8x256xf32, #tpu.memory_space<vmem>>, vector<8x256xf32>,
    return
  }
  func.func @transform_0(%arg0: i32) -> (i32, i32) {
    %c0_i32 = arith.constant 0 : i32
    %c0_i32_0 = arith.constant 0 : i32
    return %arg0, %c0_i32 : i32, i32
  }
  func.func @transform_1(%arg0: i32) -> (i32, i32) {
    %c0_i32 = arith.constant 0 : i32
    %c0_i32_0 = arith.constant 0 : i32
    %c0_i32_1 = arith.constant 0 : i32
    return %c0_i32, %c0_i32_0 : i32, i32
  }
  func.func @transform_2(%arg0: i32) -> (i32, i32) {
    %c0_i32 = arith.constant 0 : i32
    %c0_i32_0 = arith.constant 0 : i32
    return %arg0, %c0_i32 : i32, i32
  }
}

</mosaic_0001>

<llo_original>
// kernel: tpu_custom_call.1
$region0: #{tpu_custom_call.1}
  #allocation0 [shape = 'u32[]', space=smem, size = 0x4, offset = 0x4, fixed_abs, tag = 'smem constant byte address 0x4 - core index']
  #allocation1 [shape = 'u32[144,128]{1,0:T(1,128)}', space=vmem, size = 0x12000, scoped, tag = 'internal scratch']
  %s0 = inlined_call_operand.hbm [shape: f32[8,256], index: 0, kind: input, shape index: {}]
  %s1 = inlined_call_operand.vmem [shape: f32[1,256], index: 1, kind: input, shape index: {}]
  %s2 = inlined_call_operand.hbm [shape: f32[8,256], index: 2, kind: output, shape index: {}]
  %s3 = sld [smem:[#allocation0]]
  $region22: #{tpu_custom_call.1} parent=0
    _
  %s5 = ssub.s32 1, %s3
  %s6 = scalar_select 0, %s5, %s3
  $region1: #{tpu_custom_call.1} parent=0
    #allocation2 [shape = 'u8[8192]{0}', space=vmem, size = 0x2000, scoped, tag = 'input window, operand 0, single buffered']
    #allocation3 [shape = 's32[1]{0}', space=sflag, size = 0x4, scoped, tag = 'scoped memory for tpu_custom_call.1']
    #allocation4 [shape = 's32[1]{0}', space=sflag, size = 0x4, scoped, tag = 'scoped memory for tpu_custom_call.1']
    #allocation5 [shape = 'u8[8192]{0}', space=vmem, size = 0x2000, scoped, tag = 'output window, operand 0, single buffered']
    %7 = vsyncpa [#allocation3], 0
    %8 = vsyncpa [#allocation4], 0
    // Predicated region
    $region2: #{tpu_custom_call.1} parent=1 // pred_check
      _
    $region3: #{tpu_custom_call.1} parent=1 // pred_check_branch
      %10 = sbr.rel (0) target = $region5
    $region4: #{tpu_custom_call.1} parent=1 // pred_region
      %s12 = ssub.s32 256, 256
      %13 = vsyncadd [#allocation3], %s12
      %s15 = sshll.u32 [#allocation2], 4
      %s16 = int_to_ptr.vmem [resolvable:$true] %s15
      %18 = dma.hbm_to_vmem [thread:$0]  %s0, 256, %s16, [#allocation3]
    $region5: #{tpu_custom_call.1} parent=1 // pred_fallthru
      _
    // Predicated region
    $region6: #{tpu_custom_call.1} parent=1 // pred_check
      _
    $region7: #{tpu_custom_call.1} parent=1 // pred_check_branch
      %20 = sbr.rel (0) target = $region9
    $region8: #{tpu_custom_call.1} parent=1 // pred_region
      _
    $region9: #{tpu_custom_call.1} parent=1 // pred_fallthru
      _
    // Predicated region
    $region10: #{tpu_custom_call.1} parent=1 // pred_check
      _
    $region11: #{tpu_custom_call.1} parent=1 // pred_check_branch
      %22 = sbr.rel (0) target = $region13
    $region12: #{tpu_custom_call.1} parent=1 // pred_region
      %23 = dma.done [#allocation3], 256
    $region13: #{tpu_custom_call.1} parent=1 // pred_fallthru
      _
    %v24 = vld [vmem:[#allocation2] sm:$0xff]
    %v25 = vld [vmem:[#allocation2 + $0x8] sm:$0xff]
    %v26 = vld [vmem:[%s1] sm:$0x3]
    %v28 = vlaneseq
    %v29 = vshrl.u32 %v28, 7
    %v30 = vsub.s32 0, %v29
    %v31 = vrot.slane %v26, %v30
    %v32 = vlaneseq
    %v33 = vshrl.u32 %v32, 7
    %v34 = vsub.s32 1, %v33
    %v35 = vrot.slane %v26, %v34
    %v38 = vadd.f32 %v24, %v31
    %v39 = vadd.f32 %v25, %v35
    %40 = vst [vmem:[#allocation5] sm:$0xff] %v38
    %41 = vst [vmem:[#allocation5 + $0x8] sm:$0xff] %v39
    // Predicated region
    $region14: #{tpu_custom_call.1} parent=1 // pred_check
      _
    $region15: #{tpu_custom_call.1} parent=1 // pred_check_branch
      %43 = sbr.rel (0) target = $region17
    $region16: #{tpu_custom_call.1} parent=1 // pred_region
      %s45 = ssub.s32 256, 256
      %46 = vsyncadd [#allocation4], %s45
      %s48 = sshll.u32 [#allocation5], 4
      %s49 = int_to_ptr.vmem [resolvable:$true] %s48
      %51 = dma.vmem_to_hbm [thread:$0]  %s49, 256, %s2, [#allocation4]
    $region17: #{tpu_custom_call.1} parent=1 // pred_fallthru
      _
    // Predicated region
    $region18: #{tpu_custom_call.1} parent=1 // pred_check
      _
    $region19: #{tpu_custom_call.1} parent=1 // pred_check_branch
      %53 = sbr.rel (0) target = $region21
    $region20: #{tpu_custom_call.1} parent=1 // pred_region
      %54 = dma.done [#allocation4], 256
    $region21: #{tpu_custom_call.1} parent=1 // pred_fallthru
      _
    %55 = vsyncpa [#allocation3], 1
    %56 = vsyncpa [#allocation4], 1

</llo_original>
